<compile_context>
chip_gen: v6e
topology: v6e:2x2x1
jax: 0.10.0
libtpu: 0.0.40
codegen_flags: <defaults>
</compile_context>

<pallas_src>
import numpy as np
import jax
import jax.numpy as jnp
from jax.experimental import pallas as pl
from jax.experimental.pallas import tpu as pltpu


# ----------------------------------------------------------------------------
# Deterministic Masksembles mask generation (same algorithm as the PyTorch
# module, but with an explicitly seeded numpy RNG so the script is
# reproducible).  Host-side, one-time setup — not part of the kernel.
# ----------------------------------------------------------------------------
def _generate_masks(m: int, n: int, s: float, rng) -> np.ndarray:
    total_positions = int(m * s)
    masks = []
    for _ in range(n):
        new_vector = np.zeros([total_positions])
        idx = rng.choice(range(total_positions), m, replace=False)
        new_vector[idx] = 1
        masks.append(new_vector)
    masks = np.array(masks)
    return masks[:, ~np.all(masks == 0, axis=0)]


def generate_masks(m: int, n: int, s: float, rng) -> np.ndarray:
    masks = _generate_masks(m, n, s, rng)
    expected_size = int(m * s * (1 - (1 - 1 / s) ** n))
    while masks.shape[1] != expected_size:
        masks = _generate_masks(m, n, s, rng)
    return masks


def generation_wrapper(c: int, n: int, scale: float, rng) -> np.ndarray:
    if c < 10:
        raise ValueError("channels must be >= 10 for Masksembles")
    if scale > 6.0:
        raise ValueError("scale must be <= 6")
    active_features = int(int(c) / (scale * (1 - (1 - 1 / scale) ** n)))
    up = 4 * scale
    down = max(0.2 * scale, 1.0)
    s = (down + up) / 2
    im_s = -1
    masks = None
    while im_s != c:
        masks = generate_masks(active_features, n, s, rng)
        im_s = masks.shape[-1]
        if im_s < c:
            down = s
            s = (down + up) / 2
        elif im_s > c:
            up = s
            s = (down + up) / 2
    return masks


def _round_up(x: int, m: int) -> int:
    return ((x + m - 1) // m) * m


# ----------------------------------------------------------------------------
# Pallas kernel: pure MXU matmul (mask pre-folded into weight) + f32 bias add.
# ----------------------------------------------------------------------------
def masked_linear_kernel(x_ref, w_ref, b_ref, o_ref):
    # x_ref: [1, TM, C]   bf16 activations: one row tile of one estimator group
    # w_ref: [1, C, TN]   bf16 pre-masked weight col tile for this estimator
    # b_ref: [1, TN]      f32 bias col tile (zero-padded, lane-dense)
    # o_ref: [1, TM, TN]  f32 output tile (lane-dense)
    acc = jnp.dot(x_ref[0], w_ref[0], preferred_element_type=jnp.float32)  # MXU
    o_ref[0] = (acc + b_ref[...]).astype(o_ref.dtype)                      # VPU


def prepare_params(masks, weight, bias):
    """One-time parameter prep (hoisted out of the per-forward path).

    Folds each estimator's binary mask into the weight and zero-pads the
    output dimension to a lane-dense multiple of 128.
    """
    n, c = masks.shape
    o = weight.shape[0]
    o_pad = _round_up(max(o, 128), 128)

    w_t = jnp.transpose(weight).astype(jnp.float32)                    # [C, O]
    w_t = jnp.pad(w_t, ((0, 0), (0, o_pad - o)))                       # [C, O_pad]
    # Multiply by {0,1} mask in f32 (exact), then cast once to bf16 for MXU.
    w_masked = (masks.astype(jnp.float32)[:, :, None] * w_t).astype(jnp.bfloat16)
    b_pad = jnp.pad(bias.astype(jnp.float32), (0, o_pad - o)).reshape(1, o_pad)

    return {
        "w_masked": jax.device_put(w_masked),   # [n, C, O_pad] bf16
        "bias": jax.device_put(b_pad),          # [1, O_pad]    f32
        "num_estimators": n,
        "in_features": c,
        "out_features": o,
        "o_pad": o_pad,
    }


def _choose_tiles(group: int, c: int, o_pad: int,
                  max_rows: int = 512, max_cols: int = 1024,
                  vmem_budget_bytes: int = 48 * 1024 * 1024):
    """Pick (tm, tn) so double-buffered operand tiles fit comfortably in VMEM."""
    tn = min(o_pad, max_cols)
    tm = min(group, max_rows)
    if tm > 8:
        tm = max(8, (tm // 8) * 8)  # keep row tiles sublane-aligned when possible

    def vmem_bytes(tm_, tn_):
        x_b = tm_ * c * 2
        w_b = c * tn_ * 2
        b_b = tn_ * 4
        o_b = tm_ * tn_ * 4
        return 2 * (x_b + w_b + b_b + o_b)      # double buffering

    while vmem_bytes(tm, tn) > vmem_budget_bytes and tn > 128:
        tn = max(128, tn // 2)
    while vmem_bytes(tm, tn) > vmem_budget_bytes and tm > 8:
        tm = max(8, tm // 2)
    return tm, tn


def masked_linear_forward(x, params):
    """x: [B, C] float32 -> [B, out_features] float32."""
    n = params["num_estimators"]
    c = params["in_features"]
    o = params["out_features"]
    o_pad = params["o_pad"]

    b, c_in = x.shape
    assert c_in == c
    assert b % n == 0, "batch must be divisible by num_estimators"
    group = b // n

    tm, tn = _choose_tiles(group, c, o_pad)
    n_row_tiles = pl.cdiv(group, tm)
    n_col_tiles = pl.cdiv(o_pad, tn)

    # Reshape so a row tile can never span two estimator groups.
    x3 = x.reshape(n, group, c).astype(jnp.bfloat16)                   # [n, G, C]

    cost = pl.CostEstimate(
        flops=2 * b * c * o_pad,
        transcendentals=0,
        bytes_accessed=(x3.size * 2 + params["w_masked"].size * 2
                        + params["bias"].size * 4 + b * o_pad * 4),
    )

    out = pl.pallas_call(
        masked_linear_kernel,
        out_shape=jax.ShapeDtypeStruct((n, group, o_pad), jnp.float32),
        grid=(n, n_row_tiles, n_col_tiles),
        in_specs=[
            pl.BlockSpec((1, tm, c), lambda g, r, j: (g, r, 0)),
            pl.BlockSpec((1, c, tn), lambda g, r, j: (g, 0, j)),
            pl.BlockSpec((1, tn), lambda g, r, j: (0, j)),
        ],
        out_specs=pl.BlockSpec((1, tm, tn), lambda g, r, j: (g, r, j)),
        compiler_params=pltpu.CompilerParams(
            dimension_semantics=("parallel", "parallel", "parallel")),
        cost_estimate=cost,
    )(x3, params["w_masked"], params["bias"])

    return out.reshape(b, o_pad)[:, :o]


# ----------------------------------------------------------------------------
# References.
# ----------------------------------------------------------------------------
def reference_exact(x, masks, weight, bias, num_estimators):
    """Exact f32 mirror of the PyTorch forward."""
    b = x.shape[0]
    group = b // num_estimators
    row_masks = jnp.repeat(masks.astype(jnp.float32), group, axis=0)
    return (x * row_masks) @ weight.T.astype(jnp.float32) + bias.astype(jnp.float32)


def reference_bf16(x, params):
    """Same math as the kernel (bf16 operands, f32 accumulation)."""
    n = params["num_estimators"]
    b = x.shape[0]
    group = b // n
    x3 = x.reshape(n, group, -1).astype(jnp.bfloat16)
    out = jnp.einsum("gbc,gco->gbo", x3, params["w_masked"],
                     preferred_element_type=jnp.float32) + params["bias"]
    return out.reshape(b, -1)[:, :params["out_features"]]


if __name__ == "__main__":
    in_features = 32
    out_features = 16
    num_estimators = 4
    scale = 2.0
    batch = 8  # must be a multiple of num_estimators

    # Deterministic Masksembles masks.
    np_rng = np.random.default_rng(0)
    masks_np = generation_wrapper(in_features, num_estimators, scale, np_rng)
    assert masks_np.shape == (num_estimators, in_features)
    masks = jnp.asarray(masks_np, dtype=jnp.float32)

    # Deterministic parameters (nn.Linear-style uniform init).
    key = jax.random.PRNGKey(0)
    kx, kw, kb = jax.random.split(key, 3)
    bound = 1.0 / np.sqrt(in_features)
    weight = jax.random.uniform(
        kw, (out_features, in_features), jnp.float32, -bound, bound)
    bias = jax.random.uniform(kb, (out_features,), jnp.float32, -bound, bound)

    # Deterministic input.
    x = jax.random.normal(kx, (batch, in_features), dtype=jnp.float32)

    # One-time init work (mask folded into weight, padding, casts).
    params = prepare_params(masks, weight, bias)

    out = masked_linear_forward(x, params)
    out = jax.block_until_ready(out)

    # Tight check against a reference using the same bf16 operands.
    ref_b = reference_bf16(x, params)
    np.testing.assert_allclose(np.asarray(out), np.asarray(ref_b),
                               rtol=1e-4, atol=1e-5)

    # Loose check against exact f32 PyTorch semantics (bf16 operand rounding).
    ref = reference_exact(x, masks, weight, bias, num_estimators)
    np.testing.assert_allclose(np.asarray(out), np.asarray(ref),
                               rtol=3e-2, atol=3e-2)

    print("KERNEL_OK")
</pallas_src>

<mosaic_0001>
module attributes {stable_mosaic.version = 11 : i64} {
  func.func @masked_linear_kernel(%arg0: i32, %arg1: i32, %arg2: i32, %arg3: memref<1x2x32xbf16, #tpu.memory_space<vmem>>, %arg4: memref<1x32x128xbf16, #tpu.memory_space<vmem>>, %arg5: memref<1x128xf32, #tpu.memory_space<vmem>>, %arg6: memref<1x2x128xf32, #tpu.memory_space<vmem>>) attributes {dimension_semantics = [#tpu.dimension_semantics<parallel>, #tpu.dimension_semantics<parallel>, #tpu.dimension_semantics<parallel>], iteration_bounds = array<i64: 4, 1, 1>, scalar_prefetch = 0 : i64, scratch_operands = 0 : i64, tpu.core_type = #tpu.core_type<tc>, window_params = [{transform_indices = @transform_0, window_bounds = array<i64: 1, 2, 32>}, {transform_indices = @transform_1, window_bounds = array<i64: 1, 32, 128>}, {transform_indices = @transform_2, window_bounds = array<i64: 1, 128>}, {transform_indices = @transform_3, window_bounds = array<i64: 1, 2, 128>}]} {
    %c0 = arith.constant 0 : index
    %c0_0 = arith.constant 0 : index
    %c0_1 = arith.constant 0 : index
    %0 = vector.load %arg3[%c0, %c0_0, %c0_1] : memref<1x2x32xbf16, #tpu.memory_space<vmem>>, vector<1x2x32xbf16>
    %1 = vector.shape_cast %0 : vector<1x2x32xbf16> to vector<2x32xbf16>
    %c0_2 = arith.constant 0 : index
    %c0_3 = arith.constant 0 : index
    %c0_4 = arith.constant 0 : index
    %2 = vector.load %arg4[%c0_2, %c0_3, %c0_4] : memref<1x32x128xbf16, #tpu.memory_space<vmem>>, vector<1x32x128xbf16>
    %3 = vector.shape_cast %2 : vector<1x32x128xbf16> to vector<32x128xbf16>
    %cst = arith.constant dense<0.000000e+00> : vector<2x128xf32>
    %4 = tpu.matmul %1, %3, %cst {dimension_numbers = #tpu.dot_dimension_numbers<[1], [0], [0], [1], [0, 0, 1, 1], [], []>} : vector<2x32xbf16>, vector<32x128xbf16>, vector<2x128xf32> -> vector<2x128xf32>
    %c0_5 = arith.constant 0 : index
    %c0_6 = arith.constant 0 : index
    %5 = vector.load %arg5[%c0_5, %c0_6] : memref<1x128xf32, #tpu.memory_space<vmem>>, vector<1x128xf32>
    %6 = vector.broadcast %5 : vector<1x128xf32> to vector<2x128xf32>
    %7 = arith.addf %4, %6 : vector<2x128xf32>
    %c0_7 = arith.constant 0 : index
    %c0_8 = arith.constant 0 : index
    %c0_9 = arith.constant 0 : index
    %8 = vector.load %arg6[%c0_7, %c0_8, %c0_9] : memref<1x2x128xf32, #tpu.memory_space<vmem>>, vector<1x2x128xf32>
    %9 = vector.shape_cast %8 : vector<1x2x128xf32> to vector<2x128xf32>
    %10 = vector.shape_cast %7 : vector<2x128xf32> to vector<1x2x128xf32>
    tpu.vector_store %arg6[%c0_7, %c0_8, %c0_9], %10 {strides = array<i32>} : memref<1x2x128xf32, #tpu.memory_space<vmem>>, vector<1x2x128xf32>,
    return
  }
  func.func @transform_0(%arg0: i32, %arg1: i32, %arg2: i32) -> (i32, i32, i32) {
    %c0_i32 = arith.constant 0 : i32
    %c0_i32_0 = arith.constant 0 : i32
    return %arg0, %arg1, %c0_i32 : i32, i32, i32
  }
  func.func @transform_1(%arg0: i32, %arg1: i32, %arg2: i32) -> (i32, i32, i32) {
    %c0_i32 = arith.constant 0 : i32
    %c0_i32_0 = arith.constant 0 : i32
    return %arg0, %c0_i32, %arg2 : i32, i32, i32
  }
  func.func @transform_2(%arg0: i32, %arg1: i32, %arg2: i32) -> (i32, i32) {
    %c0_i32 = arith.constant 0 : i32
    %c0_i32_0 = arith.constant 0 : i32
    return %c0_i32, %arg2 : i32, i32
  }
  func.func @transform_3(%arg0: i32, %arg1: i32, %arg2: i32) -> (i32, i32, i32) {
    %c0_i32 = arith.constant 0 : i32
    return %arg0, %arg1, %arg2 : i32, i32, i32
  }
}

</mosaic_0001>

<llo_original>
// kernel: tpu_custom_call.1
$region0: #{tpu_custom_call.1}
  #allocation0 [shape = 'u32[]', space=smem, size = 0x4, offset = 0x4, fixed_abs, tag = 'smem constant byte address 0x4 - core index']
  #allocation1 [shape = 'u32[144,128]{1,0:T(1,128)}', space=vmem, size = 0x12000, scoped, tag = 'internal scratch']
  %s0 = inlined_call_operand.hbm [shape: bf16[4,2,32], index: 0, kind: input, shape index: {}]
  %s1 = inlined_call_operand.hbm [shape: bf16[4,32,128], index: 1, kind: input, shape index: {}]
  %s2 = inlined_call_operand.vmem [shape: f32[1,128], index: 2, kind: input, shape index: {}]
  %s3 = inlined_call_operand.hbm [shape: f32[4,2,128], index: 3, kind: output, shape index: {}]
  %s4 = sld [smem:[#allocation0]]
  $region53: #{tpu_custom_call.1} parent=0
    _
  %s6 = ssub.s32 1, %s4
  %s7 = scalar_select 0, %s6, %s4
  $region1: #{tpu_custom_call.1} parent=0
    #allocation2 [shape = 'u8[1024]{0}', space=vmem, size = 0x400, scoped, tag = 'input window, operand 0']
    #allocation3 [shape = 's32[2]{0}', space=sflag, size = 0x8, scoped, tag = 'scoped memory for tpu_custom_call.1']
    #allocation4 [shape = 's32[2]{0}', space=sflag, size = 0x8, scoped, tag = 'scoped memory for tpu_custom_call.1']
    #allocation5 [shape = 'u8[16384]{0}', space=vmem, size = 0x4000, scoped, tag = 'input window, operand 1']
    #allocation6 [shape = 's32[2]{0}', space=sflag, size = 0x8, scoped, tag = 'scoped memory for tpu_custom_call.1']
    #allocation7 [shape = 'u8[2048]{0}', space=vmem, size = 0x800, scoped, tag = 'output window, operand 0']
    %8 = vsyncpa [#allocation3], 0
    %s9 = scalar_lea.sflag [#allocation3], 1
    %10 = vsyncpa %s9, 0
    %11 = vsyncpa [#allocation6], 0
    %s12 = scalar_lea.sflag [#allocation6], 1
    %13 = vsyncpa %s12, 0
    %14 = vsyncpa [#allocation4], 0
    %s15 = scalar_lea.sflag [#allocation4], 1
    %16 = vsyncpa %s15, 0
    loop: start=0, step=1, limit=6
    $region2: #{tpu_custom_call.1} parent=1 // loop_pre_header
      _
    $region3: #{tpu_custom_call.1} parent=1 // loop_header
      %s18 = sphi 0, %s22
      %p19 = scmp.ge.s32.totalorder %s18, 6
      %s25 = sphi 0, %s44
      %s26 = sphi 0, %s40
      %s27 = sphi 0, %s36
      %s28 = sphi 0, %s25
      %s29 = sphi 0, %s26
      %s30 = sphi 0, %s27
      %s31 = sphi 0, %s28
      %s32 = sphi 0, %s29
      %s33 = sphi 0, %s30
      %s49 = sphi 0, %s51
      %s52 = sphi 0, %s49
      %s53 = sphi 0, %s52
      %s69 = sphi 0, %s53
      %s77 = sphi 0, %s79
      %s80 = sphi 0, %s77
      %s81 = sphi 0, %s80
      %s97 = sphi 0, %s81
      %s103 = sphi 0, %s105
      %s106 = sphi 0, %s103
      %s107 = sphi 0, %s106
      %s123 = sphi 0, %s107
      %s133 = sphi 0, %s135
      %s136 = sphi 0, %s133
      %s137 = sphi 0, %s136
      %s153 = sphi 0, %s137
    $region4: #{tpu_custom_call.1} parent=1 // loop_header_branch
      %21 = sbr.rel (%p19) target = $region8
    $region5: #{tpu_custom_call.1} parent=1 // loop_body
      %s23 = ssub.s32 %s18, 1
      %s24 = ssub.s32 %s18, 2
      %s34 = sadd.s32 1, %s27
      %p35 = scmp.ge.s32.totalorder %s34, 1
      %s36 = scalar_select %p35, 0, %s34
      %s37 = sadd.s32 1, %s26
      %s38 = scalar_select %p35, %s37, %s26
      %p39 = scmp.ge.s32.totalorder %s38, 1
      %s40 = scalar_select %p39, 0, %s38
      %s41 = sadd.s32 1, %s25
      %s42 = scalar_select %p39, %s41, %s25
      %p43 = scmp.ge.s32.totalorder %s42, 4
      %s44 = scalar_select %p43, 0, %s42
      %s45 = ssub.s32 %s25, %s44
      %s46 = ssub.s32 %s26, %s40
      %s47 = sor.u32 %s45, %s46
      %p48 = scmp.eq.s32.totalorder %s47, 0
      %s50 = sadd.s32 %s49, 1
      %s51 = scalar_select %p48, %s49, %s50
      %p54 = pneg %p48
      %p55 = scmp.eq.s32.totalorder %s18, 3
      %p56 = por %p54, %p55
      %p57 = scmp.ne.s32.totalorder %s49, %s52
      %p58 = scmp.eq.s32.totalorder %s18, 0
      %p59 = por %p57, %p58
      %p60 = scmp.ne.s32.totalorder %s49, %s52
      %p61 = scmp.eq.s32.totalorder %s23, 3
      %p62 = por %p60, %p61
      %p63 = scmp.ne.s32.totalorder %s52, %s53
      %p64 = scmp.eq.s32.totalorder %s23, 0
      %p65 = por %p63, %p64
      %p66 = scmp.ne.s32.totalorder %s52, %s53
      %p67 = scmp.eq.s32.totalorder %s24, 3
      %p68 = por %p66, %p67
      %p70 = scmp.ne.s32.totalorder %s53, %s69
      %p71 = scmp.eq.s32.totalorder %s24, 0
      %p72 = por %p70, %p71
      %s73 = ssub.s32 %s25, %s44
      %s74 = ssub.s32 %s27, %s36
      %s75 = sor.u32 %s73, %s74
      %p76 = scmp.eq.s32.totalorder %s75, 0
      %s78 = sadd.s32 %s77, 1
      %s79 = scalar_select %p76, %s77, %s78
      %p82 = pneg %p76
      %p83 = scmp.eq.s32.totalorder %s18, 3
      %p84 = por %p82, %p83
      %p85 = scmp.ne.s32.totalorder %s77, %s80
      %p86 = scmp.eq.s32.totalorder %s18, 0
      %p87 = por %p85, %p86
      %p88 = scmp.ne.s32.totalorder %s77, %s80
      %p89 = scmp.eq.s32.totalorder %s23, 3
      %p90 = por %p88, %p89
      %p91 = scmp.ne.s32.totalorder %s80, %s81
      %p92 = scmp.eq.s32.totalorder %s23, 0
      %p93 = por %p91, %p92
      %p94 = scmp.ne.s32.totalorder %s80, %s81
      %p95 = scmp.eq.s32.totalorder %s24, 3
      %p96 = por %p94, %p95
      %p98 = scmp.ne.s32.totalorder %s81, %s97
      %p99 = scmp.eq.s32.totalorder %s24, 0
      %p100 = por %p98, %p99
      %s101 = ssub.s32 %s27, %s36
      %p102 = scmp.eq.s32.totalorder %s101, 0
      %s104 = sadd.s32 %s103, 1
      %s105 = scalar_select %p102, %s103, %s104
      %p108 = pneg %p102
      %p109 = scmp.eq.s32.totalorder %s18, 3
      %p110 = por %p108, %p109
      %p111 = scmp.ne.s32.totalorder %s103, %s106
      %p112 = scmp.eq.s32.totalorder %s18, 0
      %p113 = por %p111, %p112
      %p114 = scmp.ne.s32.totalorder %s103, %s106
      %p115 = scmp.eq.s32.totalorder %s23, 3
      %p116 = por %p114, %p115
      %p117 = scmp.ne.s32.totalorder %s106, %s107
      %p118 = scmp.eq.s32.totalorder %s23, 0
      %p119 = por %p117, %p118
      %p120 = scmp.ne.s32.totalorder %s106, %s107
      %p121 = scmp.eq.s32.totalorder %s24, 3
      %p122 = por %p120, %p121
      %p124 = scmp.ne.s32.totalorder %s107, %s123
      %p125 = scmp.eq.s32.totalorder %s24, 0
      %p126 = por %p124, %p125
      %s127 = ssub.s32 %s25, %s44
      %s128 = ssub.s32 %s26, %s40
      %s129 = sor.u32 %s127, %s128
      %s130 = ssub.s32 %s27, %s36
      %s131 = sor.u32 %s129, %s130
      %p132 = scmp.eq.s32.totalorder %s131, 0
      %s134 = sadd.s32 %s133, 1
      %s135 = scalar_select %p132, %s133, %s134
      %p138 = pneg %p132
      %p139 = scmp.eq.s32.totalorder %s18, 3
      %p140 = por %p138, %p139
      %p141 = scmp.ne.s32.totalorder %s133, %s136
      %p142 = scmp.eq.s32.totalorder %s18, 0
      %p143 = por %p141, %p142
      %p144 = scmp.ne.s32.totalorder %s133, %s136
      %p145 = scmp.eq.s32.totalorder %s23, 3
      %p146 = por %p144, %p145
      %p147 = scmp.ne.s32.totalorder %s136, %s137
      %p148 = scmp.eq.s32.totalorder %s23, 0
      %p149 = por %p147, %p148
      %p150 = scmp.ne.s32.totalorder %s136, %s137
      %p151 = scmp.eq.s32.totalorder %s24, 3
      %p152 = por %p150, %p151
      %p154 = scmp.ne.s32.totalorder %s137, %s153
      %p155 = scmp.eq.s32.totalorder %s24, 0
      %p156 = por %p154, %p155
      %p157 = scmp.le.s32.totalorder 1, %s18
      %p158 = scmp.lt.s32.totalorder %s18, 5
      %p159 = pnand %p157, %p158
      %p160 = pneg %p159
      // Predicated region
      $region9: #{tpu_custom_call.1} parent=5 // pred_check
        _
      $region10: #{tpu_custom_call.1} parent=5 // pred_check_branch
        %162 = sbr.rel (%p159) target = $region12
      $region11: #{tpu_custom_call.1} parent=5 // pred_region
        %s163 = ssub.s32 %s18, 1
        // Predicated region
        $region13: #{tpu_custom_call.1} parent=11 // pred_check
          %p164 = pneg %p119
        $region14: #{tpu_custom_call.1} parent=11 // pred_check_branch
          %166 = sbr.rel (%p164) target = $region16
        $region15: #{tpu_custom_call.1} parent=11 // pred_region
          %p167 = scmp.lt.s32.totalorder %s30, 0
          %s168 = scalar_select %p167, %s30, 0
          %s169 = scalar_lea.vmem %s2, %s168
        $region16: #{tpu_custom_call.1} parent=11 // pred_fallthru
          _
      $region12: #{tpu_custom_call.1} parent=5 // pred_fallthru
        _
      %p170 = scmp.lt.s32.totalorder %s18, 4
      // Predicated region
      $region17: #{tpu_custom_call.1} parent=5 // pred_check
        %p171 = pneg %p170
      $region18: #{tpu_custom_call.1} parent=5 // pred_check_branch
        %173 = sbr.rel (%p171) target = $region20
      $region19: #{tpu_custom_call.1} parent=5 // pred_region
        // Predicated region
        $region21: #{tpu_custom_call.1} parent=19 // pred_check
          %p174 = pneg %p59
        $region22: #{tpu_custom_call.1} parent=19 // pred_check_branch
          %176 = sbr.rel (%p174) target = $region24
        $region23: #{tpu_custom_call.1} parent=19 // pred_region
          %s177 = sand.u32 %s49, 1
          %s178 = scalar_lea.sflag [#allocation3], %s177
          %s179 = sand.u32 %s49, 1
          %s180 = scalar_lea.vmem [#allocation2], %s179
          %s182 = ssub.s32 16, 16
          %183 = vsyncadd %s178, %s182
          %s184 = sadd.s32 %s26, %s25
          %s185 = smul.addr %s184, 16
          %s186 = scalar_lea.hbm %s0, %s185
          %s188 = sshll.u32 %s180, 4
          %s189 = int_to_ptr.vmem [resolvable:$true] %s188
          %191 = dma.hbm_to_vmem [thread:$0]  %s186, 16, %s189, %s178
        $region24: #{tpu_custom_call.1} parent=19 // pred_fallthru
          _
        // Predicated region
        $region25: #{tpu_custom_call.1} parent=19 // pred_check
          %p192 = pneg %p87
        $region26: #{tpu_custom_call.1} parent=19 // pred_check_branch
          %194 = sbr.rel (%p192) target = $region28
        $region27: #{tpu_custom_call.1} parent=19 // pred_region
          %s195 = sand.u32 %s77, 1
          %s196 = scalar_lea.sflag [#allocation6], %s195
          %s197 = sand.u32 %s77, 1
          %s198 = smul.addr %s197, 16
          %s199 = scalar_lea.vmem [#allocation5], %s198
          %s201 = ssub.s32 256, 256
          %202 = vsyncadd %s196, %s201
          %s203 = smul.addr %s25, 4
          %s204 = sadd.s32 %s27, %s203
          %s205 = smul.addr %s204, 64
          %s206 = scalar_lea.hbm %s1, %s205
          %s207 = sshll.u32 %s199, 4
          %s208 = int_to_ptr.vmem [resolvable:$true] %s207
          %213 = dma.hbm_to_vmem [thread:$0]  %s206, 256, %s208, %s196, 64, 64, 4
        $region28: #{tpu_custom_call.1} parent=19 // pred_fallthru
          _
      $region20: #{tpu_custom_call.1} parent=5 // pred_fallthru
        _
      %p214 = scmp.le.s32.totalorder 1, %s18
      %p215 = scmp.lt.s32.totalorder %s18, 5
      %p216 = pnand %p214, %p215
      %p217 = pneg %p216
      // Predicated region
      $region29: #{tpu_custom_call.1} parent=5 // pred_check
        _
      $region30: #{tpu_custom_call.1} parent=5 // pred_check_branch
        %219 = sbr.rel (%p216) target = $region32
      $region31: #{tpu_custom_call.1} parent=5 // pred_region
        %s220 = ssub.s32 %s18, 1
        %s221 = sand.u32 %s52, 1
        %s222 = scalar_lea.sflag [#allocation3], %s221
        %s223 = sand.u32 %s52, 1
        %s224 = scalar_lea.vmem [#allocation2], %s223
        // Predicated region
        $region33: #{tpu_custom_call.1} parent=31 // pred_check
          %p225 = pneg %p65
        $region34: #{tpu_custom_call.1} parent=31 // pred_check_branch
          %227 = sbr.rel (%p225) target = $region36
        $region35: #{tpu_custom_call.1} parent=31 // pred_region
          %228 = dma.done %s222, 16
        $region36: #{tpu_custom_call.1} parent=31 // pred_fallthru
          _
        %s229 = sand.u32 %s80, 1
        %s230 = scalar_lea.sflag [#allocation6], %s229
        %s231 = sand.u32 %s80, 1
        %s232 = smul.addr %s231, 16
        %s233 = scalar_lea.vmem [#allocation5], %s232
        // Predicated region
        $region37: #{tpu_custom_call.1} parent=31 // pred_check
          %p234 = pneg %p93
        $region38: #{tpu_custom_call.1} parent=31 // pred_check_branch
          %236 = sbr.rel (%p234) target = $region40
        $region39: #{tpu_custom_call.1} parent=31 // pred_region
          %237 = dma.done %s230, 256
        $region40: #{tpu_custom_call.1} parent=31 // pred_fallthru
          _
        %s238 = sand.u32 %s52, 1
        %s239 = scalar_lea.sflag [#allocation3], %s238
        %s240 = sand.u32 %s52, 1
        %s241 = scalar_lea.vmem [#allocation2], %s240
        %p242 = pneg %p65
        %p243 = pneg %p62
        %s244 = sand.u32 %s80, 1
        %s245 = scalar_lea.sflag [#allocation6], %s244
        %s246 = sand.u32 %s80, 1
        %s247 = smul.addr %s246, 16
        %s248 = scalar_lea.vmem [#allocation5], %s247
        %p249 = pneg %p93
        %p250 = pneg %p90
        %p251 = scmp.lt.s32.totalorder %s30, 0
        %s252 = scalar_select %p251, %s30, 0
        %s253 = scalar_lea.vmem %s2, %s252
        %p254 = pneg %p119
        %p255 = pneg %p116
        %p256 = pneg %p149
        %p257 = pneg %p146
        %s258 = sand.u32 %s136, 1
        %s259 = scalar_lea.sflag [#allocation4], %s258
        %s260 = sand.u32 %s136, 1
        %s261 = smul.addr %s260, 2
        %s262 = scalar_lea.vmem [#allocation7], %s261
        %p263 = scmp.lt.s32.totalorder %s30, 0
        %s264 = scalar_select %p263, %s30, 0
        %s265 = scalar_lea.vmem %s2, %s264
        %v267 = vld [vmem:[%s224] sm:$0x1]
        %v268 = vld [vmem:[%s233] sm:$0xf]
        %v269 = vld [vmem:[%s233 + $0x4] sm:$0xf]
        %v270 = vld [vmem:[%s233 + $0x8] sm:$0xf]
        %v271 = vld [vmem:[%s233 + $0xc] sm:$0xf]
        %v272 = vld [vmem:[%s265] sm:$0x1]
        %v274 = vlaneseq
        %v275 = vshrl.u32 %v274, 7
        %v276 = vsub.s32 0, %v275
        %v277 = vrot.slane %v272, %v276
        %v283 = vunpack.c.l.b16 %v268
        %v284 = vunpack.c.l.b16 %v269
        %v285 = vunpack.c.l.b16 %v270
        %v286 = vunpack.c.l.b16 %v271
        %v287 = vpack.c.b16 %v284, %v283
        %v288 = vpack.c.b16 %v286, %v285
        %vm291 = vcmask 261120
        %v293 = vsel %vm291, %v267, 0
        %295 = vmatprep.subr.bf16.mxu0 0
        %296 = vmatpush1.bf16.msra.mxu0 0
        %297 = vmatprep.subr.bf16.mxu0 0
        %298 = vmatpush1.bf16.msra.mxu0 0
        %299 = vmatprep.subr.bf16.mxu0 0
        %300 = vmatpush1.bf16.msra.mxu0 0
        %301 = vmatprep.subr.bf16.mxu0 0
        %302 = vmatpush1.bf16.msra.mxu0 0
        %303 = vmatprep.subr.bf16.mxu0 0
        %304 = vmatpush1.bf16.msra.mxu0 0
        %305 = vmatprep.subr.bf16.mxu0 0
        %306 = vmatpush1.bf16.msra.mxu0 0
        %307 = vmatprep.subr.bf16.mxu0 0
        %308 = vmatpush1.bf16.msra.mxu0 %v288
        %309 = vmatprep.subr.bf16.mxu0 0
        %310 = vmatpush1.bf16.msra.mxu0 %v287
        %311 = vmatprep.subr.bf16.mxu0 0
        %312 = vmatpush2.bf16.msra.mxu0 0
        %313 = vmatprep.subr.bf16.mxu0 0
        %314 = vmatpush2.bf16.msra.mxu0 0
        %315 = vmatprep.subr.bf16.mxu0 0
        %316 = vmatpush2.bf16.msra.mxu0 0
        %317 = vmatprep.subr.bf16.mxu0 0
        %318 = vmatpush2.bf16.msra.mxu0 0
        %319 = vmatprep.subr.bf16.mxu0 0
        %320 = vmatpush2.bf16.msra.mxu0 0
        %321 = vmatprep.subr.bf16.mxu0 0
        %322 = vmatpush2.bf16.msra.mxu0 0
        %323 = vmatprep.subr.bf16.mxu0 0
        %324 = vmatpush2.bf16.msra.mxu0 0
        %325 = vmatprep.subr.bf16.mxu0 0
        %326 = vmatpush2.bf16.msra.mxu0 0
        %327 = vmatprep.mubr.bf16.mxu0 0
        %328 = vmatmul.mubr.bf16.gmra.mxu0 %v293
        %v329 = vpop.f32.mrf.mxu0
        %v330 = vadd.f32 %v277, %v329
        %v331 = vpop.f32.mrf.mxu0
        %v332 = vpop.f32.mrf.mxu0
        %v333 = vpop.f32.mrf.mxu0
        %334 = vdwg.mxu0
        %335 = vst [vmem:[%s262] sm:$0x3] %v330
        %s336 = sand.u32 %s136, 1
        %s337 = scalar_lea.sflag [#allocation4], %s336
        %s338 = sand.u32 %s136, 1
        %s339 = smul.addr %s338, 2
        %s340 = scalar_lea.vmem [#allocation7], %s339
        // Predicated region
        $region41: #{tpu_custom_call.1} parent=31 // pred_check
          %p341 = pneg %p146
        $region42: #{tpu_custom_call.1} parent=31 // pred_check_branch
          %343 = sbr.rel (%p341) target = $region44
        $region43: #{tpu_custom_call.1} parent=31 // pred_region
          %s345 = ssub.s32 32, 32
          %346 = vsyncadd %s337, %s345
          %s347 = sadd.s32 %s30, %s29
          %s348 = sadd.s32 %s347, %s28
          %s349 = smul.addr %s348, 32
          %s350 = scalar_lea.hbm %s3, %s349
          %s352 = sshll.u32 %s340, 4
          %s353 = int_to_ptr.vmem [resolvable:$true] %s352
          %355 = dma.vmem_to_hbm [thread:$0]  %s353, 32, %s350, %s337
        $region44: #{tpu_custom_call.1} parent=31 // pred_fallthru
          _
      $region32: #{tpu_custom_call.1} parent=5 // pred_fallthru
        _
      %p356 = scmp.le.s32.totalorder 2, %s18
      // Predicated region
      $region45: #{tpu_custom_call.1} parent=5 // pred_check
        %p357 = pneg %p356
      $region46: #{tpu_custom_call.1} parent=5 // pred_check_branch
        %359 = sbr.rel (%p357) target = $region48
      $region47: #{tpu_custom_call.1} parent=5 // pred_region
        %s360 = ssub.s32 %s18, 2
        // Predicated region
        $region49: #{tpu_custom_call.1} parent=47 // pred_check
          %p361 = pneg %p152
        $region50: #{tpu_custom_call.1} parent=47 // pred_check_branch
          %363 = sbr.rel (%p361) target = $region52
        $region51: #{tpu_custom_call.1} parent=47 // pred_region
          %s364 = sand.u32 %s137, 1
          %s365 = scalar_lea.sflag [#allocation4], %s364
          %s366 = sand.u32 %s137, 1
          %s367 = smul.addr %s366, 2
          %s368 = scalar_lea.vmem [#allocation7], %s367
          %369 = dma.done %s365, 32
        $region52: #{tpu_custom_call.1} parent=47 // pred_fallthru
          _
      $region48: #{tpu_custom_call.1} parent=5 // pred_fallthru
        _
    $region6: #{tpu_custom_call.1} parent=1 // loop_footer
      %s22 = sadd.s32 1, %s18
    $region7: #{tpu_custom_call.1} parent=1 // loop_footer_branch
      %17 = sbr.rel target = $region3
    $region8: #{tpu_custom_call.1} parent=1 // loop_exit
      _
    %370 = vsyncpa [#allocation3], 1
    %s371 = scalar_lea.sflag [#allocation3], 1
    %372 = vsyncpa %s371, 1
    %373 = vsyncpa [#allocation6], 1
    %s374 = scalar_lea.sflag [#allocation6], 1
    %375 = vsyncpa %s374, 1
    %376 = vsyncpa [#allocation4], 1
    %s377 = scalar_lea.sflag [#allocation4], 1
    %378 = vsyncpa %s377, 1

</llo_original>
